<compile_context>
chip_gen: v5e
topology: v5e:2x2
jax: 0.10.0
libtpu: 0.0.40
codegen_flags: <defaults>
</compile_context>

<pallas_src>
import functools

import jax
import jax.numpy as jnp
from jax import lax
from jax.experimental import pallas as pl
from jax.experimental.pallas import tpu as pltpu

H = 16
W = 16
HW = H * W                  # 256 spatial positions -> lane axis
C_IMG = 8                   # unflatten(1, (8, 16, 16)) hard-coded in the module
N_LATENT = C_IMG * HW       # 2048-dim latent vector
LEAKY_SLOPE = 0.05
LN_EPS = 1e-5               # PyTorch LayerNorm default


# --------------------------------------------------------------------------
# pltpu.roll direction calibration (we need shifted[l] == x[(l + d) % L]).
# --------------------------------------------------------------------------
def _detect_roll_sign():
    def k(x_ref, o_ref):
        o_ref[...] = pltpu.roll(x_ref[...], 1, 1)

    x = jnp.broadcast_to(jnp.arange(128, dtype=jnp.float32)[None, :], (8, 128))
    out = pl.pallas_call(
        k, out_shape=jax.ShapeDtypeStruct((8, 128), jnp.float32))(x)
    v = float(out[0, 0])
    if v == 127.0:      # np.roll semantics: out[i] = x[(i - shift) % L]
        return -1
    if v == 1.0:        # out[i] = x[(i + shift) % L]
        return 1
    raise RuntimeError(f"unexpected pltpu.roll semantics: out[0,0]={v}")


# --------------------------------------------------------------------------
# The fused kernel
# --------------------------------------------------------------------------
def _fpn_oamp_kernel(y_ref, acs_ref, wts_ref, wps_ref,
                     mask_in_ref, mask_lat_ref,
                     w_in_ref, b_in_ref, g_in_ref, bt_in_ref,
                     w_la_ref, b_la_ref, w_lb_ref, b_lb_ref,
                     g_lat_ref, bt_lat_ref,
                     w_o1_ref, b_o1_ref, w_o2_ref, b_o2_ref,
                     o_ref,
                     h_ref, patches_ref, done_ref,
                     *, lat_layers, gamma, eps, max_depth, training, roll_sign):
    B = y_ref.shape[0]
    L = B * HW
    y = y_ref[...]                                           # (B, M)

    # ----- layout plumbing between flat (B, 2048) and conv (8, B*HW) --------
    def flat_to_conv(hf):
        rows = []
        for c in range(C_IMG):
            rows.append(jnp.concatenate(
                [hf[b:b + 1, c * HW:(c + 1) * HW] for b in range(B)], axis=1))
        return jnp.concatenate(rows, axis=0)                 # (C_IMG, B*HW)

    def conv_to_flat(x):
        rows = []
        for b in range(B):
            rows.append(jnp.concatenate(
                [x[c:c + 1, b * HW:(b + 1) * HW] for c in range(C_IMG)], axis=1))
        return jnp.concatenate(rows, axis=0)                 # (B, N_LATENT)

    # ----- 3x3 conv as one im2col matmul into a persistent patch scratch ----
    def conv3x3(x, w2d, bias, act, mask_ref):
        # x: (Cin, B*HW) lane-dense; w2d: (Cout, 9*Cin); mask_ref: (9, Cin, L).
        # NOTE: rolls wrap across the batch boundary; every wrapped lane is
        # zeroed by the halo mask, so the invariant holds (center tap never
        # wraps -> skips the mask multiply).
        cin = x.shape[0]
        for t in range(9):
            dh, dw = t // 3 - 1, t % 3 - 1
            d = dh * W + dw
            shift = (roll_sign * d) % L
            xs = pltpu.roll(x, shift, 1) if shift != 0 else x
            if t == 4:
                patches_ref[t * cin:(t + 1) * cin, :] = xs
            else:
                patches_ref[t * cin:(t + 1) * cin, :] = xs * mask_ref[t]
        o = jnp.dot(w2d, patches_ref[0:9 * cin, :],
                    preferred_element_type=jnp.float32) + bias
        if act == "relu":
            return jnp.maximum(o, 0.0)
        return jnp.maximum(o, LEAKY_SLOPE * o)               # leaky relu

    # ----- per-sample LayerNorm over the whole (C,16,16) slab ---------------
    def layer_norm(x, g, b):
        inv_cnt = 1.0 / (x.shape[0] * HW)
        parts = []
        for s in range(B):
            xs = x[:, s * HW:(s + 1) * HW]                   # (C, 256) slice
            mean = jnp.sum(xs) * inv_cnt
            xc = xs - mean
            var = jnp.sum(xc * xc) * inv_cnt
            parts.append(xc * lax.rsqrt(var + LN_EPS))
        xn = jnp.concatenate(parts, axis=1)                  # (C, B*HW)
        return xn * g + b

    # ----- one fixed-point iteration (linear + nonlinear estimator) ---------
    def latent_space_forward():
        hc = h_ref[...]                                      # (C_IMG, B*HW)
        # linear estimator: h <- h + (step*W_pinv) @ (y - A @ h), fused dots
        hf = conv_to_flat(hc)                                # (B, 2048)
        z = y - jnp.dot(hf, acs_ref[...],
                        preferred_element_type=jnp.float32)  # (B, M)
        corr = jnp.dot(z, wts_ref[...],
                       preferred_element_type=jnp.float32)   # (B, 2048)
        x = hc + flat_to_conv(corr)                          # h_LE, conv layout

        # nonlinear estimator (ResNet backbone), lane-dense layout
        x = conv3x3(x, w_in_ref[...], b_in_ref[...], "leaky", mask_in_ref)
        x = layer_norm(x, g_in_ref[...], bt_in_ref[...])
        for l in range(lat_layers):
            r = conv3x3(x, w_la_ref[l], b_la_ref[l], "relu", mask_lat_ref)
            r = conv3x3(r, w_lb_ref[l], b_lb_ref[l], "relu", mask_lat_ref)
            x = layer_norm(x + r, g_lat_ref[l], bt_lat_ref[l])
        t = jnp.dot(w_o1_ref[...], x,
                    preferred_element_type=jnp.float32) + b_o1_ref[...]
        t = jnp.maximum(t, LEAKY_SLOPE * t)
        t = jnp.dot(w_o2_ref[...], t,
                    preferred_element_type=jnp.float32) + b_o2_ref[...]
        return gamma * t                                     # (C_IMG, B*HW)

    # ----- LS initialization: h0 = W_pinv @ y (one dot), to conv layout -----
    h0f = jnp.dot(y, wps_ref[...], preferred_element_type=jnp.float32)
    h_ref[...] = flat_to_conv(h0f)
    done_ref[0, 0] = jnp.int32(0)

    eps2 = eps * eps

    # ----- fixed-point loop with TRUE early exit (SMEM flag + pl.when) ------
    def body(step, carry):
        @pl.when(done_ref[0, 0] == 0)
        def _():
            h_prev = h_ref[...]
            h_new = latent_space_forward()
            d = h_new - h_prev
            dsq = d * d
            # max over batch of per-sample squared L2 residual norms
            m = jnp.sum(dsq[:, 0:HW])
            for b in range(1, B):
                m = jnp.maximum(m, jnp.sum(dsq[:, b * HW:(b + 1) * HW]))
            h_ref[...] = h_new
            done_ref[0, 0] = jnp.where(m <= eps2, jnp.int32(1), jnp.int32(0))
        return carry

    lax.fori_loop(0, max_depth, body, 0)

    if training:
        # attach-gradients pass (module default training=True)
        h_ref[...] = latent_space_forward()

    hc = h_ref[...]
    for b in range(B):
        o_ref[b] = hc[:, b * HW:(b + 1) * HW]


# --------------------------------------------------------------------------
# Wrapper
# --------------------------------------------------------------------------
def fpn_oamp_forward(ops, y, *, lat_layers, gamma, eps, max_depth,
                     training, roll_sign):
    B = y.shape[0]
    C = ops["w_in"].shape[0]
    kernel = functools.partial(
        _fpn_oamp_kernel, lat_layers=lat_layers, gamma=gamma, eps=eps,
        max_depth=max_depth, training=training, roll_sign=roll_sign)
    h3 = pl.pallas_call(
        kernel,
        out_shape=jax.ShapeDtypeStruct((B, C_IMG, HW), jnp.float32),
        scratch_shapes=[
            pltpu.VMEM((C_IMG, B * HW), jnp.float32),   # latent state (conv layout)
            pltpu.VMEM((9 * C, B * HW), jnp.float32),   # shared im2col patch buffer
            pltpu.SMEM((1, 1), jnp.int32),              # convergence flag (early exit)
        ],
    )(y, ops["acs"], ops["wts"], ops["wps"], ops["mask_in"], ops["mask_lat"],
      ops["w_in"], ops["b_in"], ops["g_in"], ops["bt_in"],
      ops["w_la"], ops["b_la"], ops["w_lb"], ops["b_lb"],
      ops["g_lat"], ops["bt_lat"],
      ops["w_o1"], ops["b_o1"], ops["w_o2"], ops["b_o2"])
    # (B, 8, 256) is exactly the NCHW flatten order -> free reshape.
    return h3.reshape(B, C_IMG * HW)


# --------------------------------------------------------------------------
# Parameters (PyTorch layouts) and kernel-operand preparation
# --------------------------------------------------------------------------
def init_params(key, num_channels, lat_layers, M):
    """Parameters in PyTorch layouts: Conv2d (Cout,Cin,kh,kw), LN (C,16,16)."""
    N = C_IMG * H * W
    keys = jax.random.split(key, 32)
    ki = iter(range(32))
    scale = 0.05

    def nrm(shape):
        return scale * jax.random.normal(keys[next(ki)], shape, jnp.float32)

    C = num_channels
    return {
        "conv_in_w": nrm((C, C_IMG, 3, 3)), "conv_in_b": nrm((C,)),
        "ln_in_w": jnp.ones((C, H, W), jnp.float32),
        "ln_in_b": jnp.zeros((C, H, W), jnp.float32),
        "lat_a_w": nrm((lat_layers, C, C, 3, 3)), "lat_a_b": nrm((lat_layers, C)),
        "lat_b_w": nrm((lat_layers, C, C, 3, 3)), "lat_b_b": nrm((lat_layers, C)),
        "ln_lat_w": jnp.ones((lat_layers, C, H, W), jnp.float32),
        "ln_lat_b": jnp.zeros((lat_layers, C, H, W), jnp.float32),
        "out1_w": nrm((C, C, 1, 1)), "out1_b": nrm((C,)),
        "out2_w": nrm((C_IMG, C, 1, 1)), "out2_b": nrm((C_IMG,)),
        # measurement matrix (full row rank, M < N)
        "A": jax.random.normal(keys[next(ki)], (M, N), jnp.float32)
             / jnp.sqrt(jnp.float32(N)),
    }


def _conv_w2d(wt):
    # (Cout, Cin, 3, 3) -> (Cout, 9*Cin), columns ordered (kh, kw, ci) to match
    # the kernel's tap order t = kh*3 + kw and per-tap channel blocks.
    co, ci = wt.shape[0], wt.shape[1]
    return wt.transpose(0, 2, 3, 1).reshape(co, 9 * ci)


def prepare_operands(p, batch):
    """Repack PyTorch-layout params into the kernel's lane-dense layouts."""
    A = p["A"]
    M, N = A.shape
    L = batch * HW
    W_pinv = jnp.linalg.solve(A @ A.T, A).T                 # pinv(A), (N, M)
    step = N / jnp.sum(W_pinv * A.T)                        # N / trace(W_pinv @ A)
    Ws = step * W_pinv

    nlat = p["lat_a_w"].shape[0]
    C = p["conv_in_w"].shape[0]
    ops = {
        # fused linear-estimator operands (single wide dots in-kernel)
        "acs": A.T,                                          # (N, M): z = y - hf @ acs
        "wts": Ws.T,                                         # (M, N): corr = z @ wts
        "wps": W_pinv.T,                                     # (M, N): h0 = y @ wps
        "w_in": _conv_w2d(p["conv_in_w"]), "b_in": p["conv_in_b"][:, None],
        "w_la": jnp.stack([_conv_w2d(p["lat_a_w"][l]) for l in range(nlat)]),
        "b_la": p["lat_a_b"][:, :, None],
        "w_lb": jnp.stack([_conv_w2d(p["lat_b_w"][l]) for l in range(nlat)]),
        "b_lb": p["lat_b_b"][:, :, None],
        "w_o1": p["out1_w"][:, :, 0, 0], "b_o1": p["out1_b"][:, None],
        "w_o2": p["out2_w"][:, :, 0, 0], "b_o2": p["out2_b"][:, None],
    }

    # LayerNorm affine: (C,16,16) -> (C, HW), tiled across batch lane blocks.
    def tile_ln(a):
        return jnp.tile(a.reshape(a.shape[0], HW), (1, batch))

    ops["g_in"] = tile_ln(p["ln_in_w"])
    ops["bt_in"] = tile_ln(p["ln_in_b"])
    ops["g_lat"] = jnp.stack([tile_ln(p["ln_lat_w"][l]) for l in range(nlat)])
    ops["bt_lat"] = jnp.stack([tile_ln(p["ln_lat_b"][l]) for l in range(nlat)])

    # Halo masks for the 9 conv taps (zero padding), pre-expanded over Cin so
    # the kernel folds them into the im2col tap stores (no in-kernel broadcast).
    hw = jnp.arange(HW)
    hh, ww = hw // W, hw % W
    tap_masks = []
    for kh in range(3):
        for kw in range(3):
            dh, dw = kh - 1, kw - 1
            valid = ((hh + dh >= 0) & (hh + dh < H) &
                     (ww + dw >= 0) & (ww + dw < W)).astype(jnp.float32)
            tap_masks.append(jnp.tile(valid, (batch,)))
    tap_mask = jnp.stack(tap_masks, axis=0)                  # (9, L)
    ops["mask_in"] = jnp.broadcast_to(tap_mask[:, None, :], (9, C_IMG, L)).copy()
    ops["mask_lat"] = jnp.broadcast_to(tap_mask[:, None, :], (9, C, L)).copy()
    return ops


# --------------------------------------------------------------------------
# main
# --------------------------------------------------------------------------
if __name__ == "__main__":
    M = 64              # number of measurements (rows of A)
    num_channels = 16   # small backbone width
    lat_layers = 3
    B = 2

    key = jax.random.PRNGKey(0)
    kp, ky = jax.random.split(key)
    params = init_params(kp, num_channels, lat_layers, M)
    y = jax.random.normal(ky, (B, M), jnp.float32)

    ops = prepare_operands(params, B)
    roll_sign = _detect_roll_sign()

    fwd = jax.jit(functools.partial(
        fpn_oamp_forward, lat_layers=lat_layers, gamma=0.99, eps=0.01,
        max_depth=15, training=True, roll_sign=roll_sign))

    h = fwd(ops, y)
    jax.block_until_ready(h)

    assert h.shape == (B, C_IMG * H * W)
    assert bool(jnp.all(jnp.isfinite(h)))
    print("KERNEL_OK")
</pallas_src>

<mosaic_0001>
module attributes {stable_mosaic.version = 11 : i64} {
  func.func @k(%arg0: memref<8x128xf32, #tpu.memory_space<vmem>>, %arg1: memref<8x128xf32, #tpu.memory_space<vmem>>) attributes {dimension_semantics = [], scalar_prefetch = 0 : i64, scratch_operands = 0 : i64, tpu.core_type = #tpu.core_type<tc>} {
    %c0 = arith.constant 0 : index
    %c0_0 = arith.constant 0 : index
    %0 = vector.load %arg0[%c0, %c0_0] : memref<8x128xf32, #tpu.memory_space<vmem>>, vector<8x128xf32>
    %c1_i32 = arith.constant 1 : i32
    %1 = tpu.dynamic_rotate %0 by %c1_i32 dim 1 : vector<8x128xf32>, i32 -> vector<8x128xf32>
    %c0_1 = arith.constant 0 : index
    %c0_2 = arith.constant 0 : index
    %2 = vector.load %arg1[%c0_1, %c0_2] : memref<8x128xf32, #tpu.memory_space<vmem>>, vector<8x128xf32>
    tpu.vector_store %arg1[%c0_1, %c0_2], %1 {strides = array<i32>} : memref<8x128xf32, #tpu.memory_space<vmem>>, vector<8x128xf32>,
    return
  }
}

</mosaic_0001>

<llo_original>
// kernel: tpu_custom_call.1
$region0: #{tpu_custom_call.1}
  #allocation0 [shape = 'u32[]', space=smem, size = 0x4, offset = 0x4, fixed_abs, tag = 'smem constant byte address 0x4 - core index']
  #allocation1 [shape = 'u32[72,128]{1,0:T(1,128)}', space=vmem, size = 0x9000, scoped, tag = 'internal scratch']
  %s0 = inlined_call_operand.hbm [shape: f32[8,128], index: 0, kind: input, shape index: {}]
  %s1 = inlined_call_operand.hbm [shape: f32[8,128], index: 1, kind: output, shape index: {}]
  %s2 = sld [smem:[#allocation0]]
  $region18: #{tpu_custom_call.1} parent=0
    _
  %s4 = ssub.s32 1, %s2
  %s5 = scalar_select 0, %s4, %s2
  $region1: #{tpu_custom_call.1} parent=0
    #allocation2 [shape = 'u8[4096]{0}', space=vmem, size = 0x1000, scoped, tag = 'input window, operand 0, single buffered']
    #allocation3 [shape = 's32[1]{0}', space=sflag, size = 0x4, scoped, tag = 'scoped memory for tpu_custom_call.1']
    #allocation4 [shape = 's32[1]{0}', space=sflag, size = 0x4, scoped, tag = 'scoped memory for tpu_custom_call.1']
    #allocation5 [shape = 'u8[4096]{0}', space=vmem, size = 0x1000, scoped, tag = 'output window, operand 0, single buffered']
    %6 = vsyncpa [#allocation3], 0
    %7 = vsyncpa [#allocation4], 0
    // Predicated region
    $region2: #{tpu_custom_call.1} parent=1 // pred_check
      _
    $region3: #{tpu_custom_call.1} parent=1 // pred_check_branch
      %9 = sbr.rel (0) target = $region5
    $region4: #{tpu_custom_call.1} parent=1 // pred_region
      %11 = vsyncadd [#allocation3], 0
      %s13 = sshll.u32 %s0, 4
      %s14 = int_to_ptr.hbm [resolvable:$true] %s13
      %s15 = sshll.u32 [#allocation2], 4
      %s16 = int_to_ptr.vmem [resolvable:$true] %s15
      %18 = dma.hbm_to_vmem [thread:$0]  %s14, 128, %s16, [#allocation3]
    $region5: #{tpu_custom_call.1} parent=1 // pred_fallthru
      _
    // Predicated region
    $region6: #{tpu_custom_call.1} parent=1 // pred_check
      _
    $region7: #{tpu_custom_call.1} parent=1 // pred_check_branch
      %20 = sbr.rel (0) target = $region9
    $region8: #{tpu_custom_call.1} parent=1 // pred_region
      %22 = dma.done [#allocation3], 128
    $region9: #{tpu_custom_call.1} parent=1 // pred_fallthru
      _
    %v23 = vld [vmem:[#allocation2] sm:$0xff]
    %24 = vrot.lane.b32.xlu0 %v23, 1
    %v25 = vpop.permute.xlu0 %24
    %26 = vst [vmem:[#allocation5] sm:$0xff] %v25
    // Predicated region
    $region10: #{tpu_custom_call.1} parent=1 // pred_check
      _
    $region11: #{tpu_custom_call.1} parent=1 // pred_check_branch
      %28 = sbr.rel (0) target = $region13
    $region12: #{tpu_custom_call.1} parent=1 // pred_region
      %30 = vsyncadd [#allocation4], 0
      %s32 = sshll.u32 [#allocation5], 4
      %s33 = int_to_ptr.vmem [resolvable:$true] %s32
      %s34 = sshll.u32 %s1, 4
      %s35 = int_to_ptr.hbm [resolvable:$true] %s34
      %37 = dma.vmem_to_hbm [thread:$0]  %s33, 128, %s35, [#allocation4]
    $region13: #{tpu_custom_call.1} parent=1 // pred_fallthru
      _
    // Predicated region
    $region14: #{tpu_custom_call.1} parent=1 // pred_check
      _
    $region15: #{tpu_custom_call.1} parent=1 // pred_check_branch
      %39 = sbr.rel (0) target = $region17
    $region16: #{tpu_custom_call.1} parent=1 // pred_region
      %41 = dma.done [#allocation4], 128
    $region17: #{tpu_custom_call.1} parent=1 // pred_fallthru
      _
    %42 = vsyncpa [#allocation3], 1
    %43 = vsyncpa [#allocation4], 1

</llo_original>
